<compile_context>
chip_gen: v7x
topology: tpu7x:2x2x1
jax: 0.10.0
libtpu: 0.0.40
codegen_flags: <defaults>
</compile_context>

<pallas_src>
import functools

import numpy as np
import jax
import jax.numpy as jnp
from jax.experimental import pallas as pl
from jax.experimental.pallas import tpu as pltpu


def _mod_int(x, m):
    """x % m for non-negative int32 x, fast path for power-of-two m."""
    if m & (m - 1) == 0:
        return jnp.bitwise_and(x, m - 1)
    return jax.lax.rem(x, jnp.full_like(x, m))


def _div_int(x, m):
    """x // m for non-negative int32 x, fast path for power-of-two m."""
    if m & (m - 1) == 0:
        return jnp.right_shift(x, m.bit_length() - 1)
    return jax.lax.div(x, jnp.full_like(x, m))


def _relu_conv_gn_kernel(x_ref, w_ref, gmat_ref, o_ref, *,
                         ksize, padding, height, width, groups, eps, nb):
    """One batch block (NB samples) per grid step.

    x_ref    : (C_in,  NB*HW)   input dtype (lane-dense, NB samples side by side)
    w_ref    : (C_out, K*K*C_in) bf16  (tap-major / channel-minor columns)
    gmat_ref : (C_out, C_out)    f32   (rows average over their own group / (cg*HW))
    o_ref    : (C_out, NB*HW)    f32
    """
    hw = height * width
    lanes_total = nb * hw
    c_out = o_ref.shape[0]

    # ReLU in the input dtype (f32 keeps the VALU native on v5e); cast to bf16
    # once per tap right before the MXU.
    x = jnp.maximum(x_ref[...], 0.0)

    # Per-lane (row, col) inside each sample's HW segment.
    lanes = jax.lax.broadcasted_iota(jnp.int32, (1, lanes_total), 1)
    col = _mod_int(lanes, width)
    row = _mod_int(_div_int(lanes, width), height)

    # Build the im2col operand in vregs: tap t = input rolled by (dh*W + dw)
    # along the flat lane axis, with out-of-image positions zeroed by a single
    # row/col mask.  Valid positions never cross sample boundaries because the
    # mask already rejects any lane whose source falls outside its own image.
    taps = []
    for t in range(ksize * ksize):
        kh, kw = divmod(t, ksize)
        dh, dw = kh - padding, kw - padding
        d = dh * width + dw
        shifted = x if d == 0 else pltpu.roll(x, shift=(-d) % lanes_total, axis=1)
        conds = []
        if dh < 0:
            conds.append(row >= -dh)
        if dh > 0:
            conds.append(row < height - dh)
        if dw < 0:
            conds.append(col >= -dw)
        if dw > 0:
            conds.append(col < width - dw)
        if conds:
            ok = functools.reduce(jnp.logical_and, conds)
            shifted = jnp.where(ok, shifted, 0.0)
        taps.append(shifted.astype(jnp.bfloat16))
    im2col = jnp.concatenate(taps, axis=0)                 # (K*K*C_in, NB*HW) bf16

    # Single deep MXU contraction, f32 accumulation.
    conv = jnp.dot(w_ref[...], im2col,
                   preferred_element_type=jnp.float32)     # (C_out, NB*HW) f32

    # GroupNorm(groups, affine=False): per-sample, per-group stats.  Two-pass
    # (centered) variance; group fold + broadcast via a tiny (C_out, C_out)
    # matmul; rsqrt on the EUP; one dense full-tile store at the end.
    gmat = gmat_ref[...]
    outs = []
    for s in range(nb):
        seg = conv[:, s * hw:(s + 1) * hw]                             # (C_out, HW)
        s1 = jnp.sum(seg, axis=1, keepdims=True)                       # (C_out, 1)
        mean = jnp.dot(gmat, s1, preferred_element_type=jnp.float32)   # group mean/row
        cent = seg - mean
        s2 = jnp.sum(cent * cent, axis=1, keepdims=True)
        var = jnp.dot(gmat, s2, preferred_element_type=jnp.float32)    # group var/row
        outs.append(cent * jax.lax.rsqrt(var + eps))
    o_ref[...] = jnp.concatenate(outs, axis=1)                         # (C_out, NB*HW)


def _pick_batch_block(n, c_in, c_out, hw, ktot, max_nb=8,
                      budget_bytes=16 * 1024 * 1024):
    """Largest divisor of n (<= max_nb) whose per-step working set fits the budget."""
    # double-buffered in/out blocks + in-kernel im2col / conv / tap values.
    per_sample = hw * (2 * c_in * 4 + 2 * c_out * 4 + ktot * 2
                       + (3 * c_in + 2 * c_out) * 4)
    nb = 1
    for cand in range(1, min(n, max_nb) + 1):
        if n % cand == 0 and cand * per_sample <= budget_bytes:
            nb = cand
    return nb


def priv_relu_conv_bn(x_nchw, w_oihw, *, stride, padding, groups=4, eps=1e-5):
    """Forward of PrivReLUConvBN. x_nchw: (N, C_in, H, W), w_oihw: (C_out, C_in, K, K)."""
    n, c_in, h, w = x_nchw.shape
    c_out, c_in_w, kh, kw = w_oihw.shape
    assert c_in_w == c_in and kh == kw, "square kernels expected"
    assert c_out % groups == 0
    h_out = (h + 2 * padding - kh) // stride + 1
    w_out = (w + 2 * padding - kw) // stride + 1
    if stride != 1 or h_out != h or w_out != w:
        # TODO(synk): general stride / non-"same" padding needs a strided im2col
        # and spatially tiled two-pass GroupNorm stat accumulation.
        raise NotImplementedError("fused kernel supports stride=1 'same' convs")

    hw = h * w
    ktot = kh * kw * c_in
    cg = c_out // groups

    nb = _pick_batch_block(n, c_in, c_out, hw, ktot)
    nblk = n // nb
    lanes = nb * hw

    # Wrapper-side layout plumbing: NB samples side by side in the lane axis.
    x_blk = (x_nchw.reshape(nblk, nb, c_in, hw)
             .transpose(0, 2, 1, 3)
             .reshape(nblk, c_in, lanes))
    # Weights as (C_out, KH*KW*C_in) bf16, tap-major / channel-minor columns.
    w_mat = jnp.transpose(w_oihw, (0, 2, 3, 1)).reshape(c_out, ktot).astype(jnp.bfloat16)
    # Group-average matrix: (gmat @ per-channel lane-sums) -> per-channel group mean.
    gid = np.repeat(np.arange(groups), cg)
    gmat = jnp.asarray((gid[:, None] == gid[None, :]).astype(np.float32)
                       / float(cg * hw))

    kernel = functools.partial(
        _relu_conv_gn_kernel, ksize=kh, padding=padding, height=h, width=w,
        groups=groups, eps=eps, nb=nb)

    cost = pl.CostEstimate(
        flops=2 * n * c_out * ktot * hw,
        transcendentals=n * groups,
        bytes_accessed=(x_nchw.size * x_nchw.dtype.itemsize
                        + w_mat.size * 2 + n * c_out * hw * 4))

    out_blk = pl.pallas_call(
        kernel,
        out_shape=jax.ShapeDtypeStruct((nblk, c_out, lanes), jnp.float32),
        grid=(nblk,),
        in_specs=[
            pl.BlockSpec((None, c_in, lanes), lambda i: (i, 0, 0)),  # batched block
            pl.BlockSpec((c_out, ktot), lambda i: (0, 0)),           # resident weights
            pl.BlockSpec((c_out, c_out), lambda i: (0, 0)),          # resident group matrix
        ],
        out_specs=pl.BlockSpec((None, c_out, lanes), lambda i: (i, 0, 0)),
        compiler_params=pltpu.CompilerParams(
            # TODO(synk): on v7x, switch this axis to pltpu.CORE_PARALLEL (grid >= 2)
            # so both TensorCores participate; plain "parallel" is the safe default.
            dimension_semantics=("parallel",),
            vmem_limit_bytes=48 * 1024 * 1024,   # headroom below v7x's 64 MiB physical
        ),
        cost_estimate=cost,
    )(x_blk, w_mat, gmat)

    return (out_blk.reshape(nblk, c_out, nb, hw)
            .transpose(0, 2, 1, 3)
            .reshape(n, c_out, h, w))


if __name__ == "__main__":
    # PrivReLUConvBN(C_in=4, C_out=8, kernel_size=3, stride=1, padding=1)
    N, C_IN, H, W = 2, 4, 16, 16
    C_OUT, K, STRIDE, PAD = 8, 3, 1, 1

    key = jax.random.PRNGKey(0)
    kx, kw_key = jax.random.split(key)
    x = jax.random.normal(kx, (N, C_IN, H, W), dtype=jnp.float32)
    fan_in = C_IN * K * K
    bound = 1.0 / float(fan_in) ** 0.5
    w = jax.random.uniform(kw_key, (C_OUT, C_IN, K, K), dtype=jnp.float32,
                           minval=-bound, maxval=bound)

    out = priv_relu_conv_bn(x, w, stride=STRIDE, padding=PAD, groups=4, eps=1e-5)
    out = jax.block_until_ready(out)
    assert out.shape == (N, C_OUT, H, W)

    # Pure-JAX reference (HIGHEST-precision conv so the comparison isolates the
    # kernel's bf16-MXU operand error; GN renormalization cancels scale error).
    xr = jnp.maximum(x, 0.0)
    conv = jax.lax.conv_general_dilated(
        xr, w, window_strides=(STRIDE, STRIDE),
        padding=((PAD, PAD), (PAD, PAD)),
        dimension_numbers=("NCHW", "OIHW", "NCHW"),
        precision=jax.lax.Precision.HIGHEST)
    grp = conv.reshape(N, 4, (C_OUT // 4) * H * W)
    mean = grp.mean(axis=-1, keepdims=True)
    var = grp.var(axis=-1, keepdims=True)
    ref = ((grp - mean) * jax.lax.rsqrt(var + 1e-5)).reshape(N, C_OUT, H, W)
    err = float(jnp.max(jnp.abs(out - ref)))
    assert jnp.allclose(out, ref, atol=5e-2, rtol=5e-2), err

    print("KERNEL_OK")
</pallas_src>

<mosaic_0001>
module attributes {stable_mosaic.version = 11 : i64} {
  func.func @_relu_conv_gn_kernel(%arg0: i32, %arg1: memref<1x4x512xf32, #tpu.memory_space<vmem>>, %arg2: memref<8x36xbf16, #tpu.memory_space<vmem>>, %arg3: memref<8x8xf32, #tpu.memory_space<vmem>>, %arg4: memref<1x8x512xf32, #tpu.memory_space<vmem>>) attributes {dimension_semantics = [#tpu.dimension_semantics<parallel>], iteration_bounds = array<i64: 1>, scalar_prefetch = 0 : i64, scratch_operands = 0 : i64, tpu.core_type = #tpu.core_type<tc>, window_params = [{transform_indices = @transform_0, window_bounds = array<i64: 1, 4, 512>}, {pipeline_mode = #tpu.pipeline_mode<synchronous>, transform_indices = @transform_1, window_bounds = array<i64: 8, 36>}, {pipeline_mode = #tpu.pipeline_mode<synchronous>, transform_indices = @transform_2, window_bounds = array<i64: 8, 8>}, {transform_indices = @transform_3, window_bounds = array<i64: 1, 8, 512>}]} {
    %c0 = arith.constant 0 : index
    %c0_0 = arith.constant 0 : index
    %c0_1 = arith.constant 0 : index
    %0 = vector.load %arg1[%c0, %c0_0, %c0_1] : memref<1x4x512xf32, #tpu.memory_space<vmem>>, vector<1x4x512xf32>
    %1 = vector.shape_cast %0 : vector<1x4x512xf32> to vector<4x512xf32>
    %cst = arith.constant 0.000000e+00 : f32
    %2 = vector.broadcast %cst : f32 to vector<4x512xf32>
    %3 = arith.maximumf %1, %2 : vector<4x512xf32>
    %4 = tpu.iota {dimensions = array<i32: 1>} : vector<1x512xi32>
    %c15_i32 = arith.constant 15 : i32
    %5 = vector.broadcast %c15_i32 : i32 to vector<1x512xi32>
    %6 = arith.andi %4, %5 : vector<1x512xi32>
    %c4_i32 = arith.constant 4 : i32
    %7 = vector.broadcast %c4_i32 : i32 to vector<1x512xi32>
    %8 = arith.shrsi %4, %7 : vector<1x512xi32>
    %c15_i32_2 = arith.constant 15 : i32
    %9 = vector.broadcast %c15_i32_2 : i32 to vector<1x512xi32>
    %10 = arith.andi %8, %9 : vector<1x512xi32>
    %c17_i32 = arith.constant 17 : i32
    %11 = tpu.dynamic_rotate %3 by %c17_i32 dim 1 : vector<4x512xf32>, i32 -> vector<4x512xf32>
    %c1_i32 = arith.constant 1 : i32
    %12 = vector.broadcast %c1_i32 : i32 to vector<1x512xi32>
    %13 = arith.cmpi sge, %10, %12 : vector<1x512xi32>
    %c1_i32_3 = arith.constant 1 : i32
    %14 = vector.broadcast %c1_i32_3 : i32 to vector<1x512xi32>
    %15 = arith.cmpi sge, %6, %14 : vector<1x512xi32>
    %16 = arith.andi %13, %15 : vector<1x512xi1>
    %cst_4 = arith.constant 0.000000e+00 : f32
    %17 = vector.shape_cast %16 : vector<1x512xi1> to vector<1x512xi1>
    %18 = vector.broadcast %17 : vector<1x512xi1> to vector<4x512xi1>
    %19 = vector.broadcast %cst_4 : f32 to vector<4x512xf32>
    %20 = arith.select %18, %11, %19 : vector<4x512xi1>, vector<4x512xf32>
    %21 = arith.truncf %20 : vector<4x512xf32> to vector<4x512xbf16>
    %c16_i32 = arith.constant 16 : i32
    %22 = tpu.dynamic_rotate %3 by %c16_i32 dim 1 : vector<4x512xf32>, i32 -> vector<4x512xf32>
    %c1_i32_5 = arith.constant 1 : i32
    %23 = vector.broadcast %c1_i32_5 : i32 to vector<1x512xi32>
    %24 = arith.cmpi sge, %10, %23 : vector<1x512xi32>
    %cst_6 = arith.constant 0.000000e+00 : f32
    %25 = vector.shape_cast %24 : vector<1x512xi1> to vector<1x512xi1>
    %26 = vector.broadcast %25 : vector<1x512xi1> to vector<4x512xi1>
    %27 = vector.broadcast %cst_6 : f32 to vector<4x512xf32>
    %28 = arith.select %26, %22, %27 : vector<4x512xi1>, vector<4x512xf32>
    %29 = arith.truncf %28 : vector<4x512xf32> to vector<4x512xbf16>
    %c15_i32_7 = arith.constant 15 : i32
    %30 = tpu.dynamic_rotate %3 by %c15_i32_7 dim 1 : vector<4x512xf32>, i32 -> vector<4x512xf32>
    %c1_i32_8 = arith.constant 1 : i32
    %31 = vector.broadcast %c1_i32_8 : i32 to vector<1x512xi32>
    %32 = arith.cmpi sge, %10, %31 : vector<1x512xi32>
    %c15_i32_9 = arith.constant 15 : i32
    %33 = vector.broadcast %c15_i32_9 : i32 to vector<1x512xi32>
    %34 = arith.cmpi slt, %6, %33 : vector<1x512xi32>
    %35 = arith.andi %32, %34 : vector<1x512xi1>
    %cst_10 = arith.constant 0.000000e+00 : f32
    %36 = vector.shape_cast %35 : vector<1x512xi1> to vector<1x512xi1>
    %37 = vector.broadcast %36 : vector<1x512xi1> to vector<4x512xi1>
    %38 = vector.broadcast %cst_10 : f32 to vector<4x512xf32>
    %39 = arith.select %37, %30, %38 : vector<4x512xi1>, vector<4x512xf32>
    %40 = arith.truncf %39 : vector<4x512xf32> to vector<4x512xbf16>
    %c1_i32_11 = arith.constant 1 : i32
    %41 = tpu.dynamic_rotate %3 by %c1_i32_11 dim 1 : vector<4x512xf32>, i32 -> vector<4x512xf32>
    %c1_i32_12 = arith.constant 1 : i32
    %42 = vector.broadcast %c1_i32_12 : i32 to vector<1x512xi32>
    %43 = arith.cmpi sge, %6, %42 : vector<1x512xi32>
    %cst_13 = arith.constant 0.000000e+00 : f32
    %44 = vector.shape_cast %43 : vector<1x512xi1> to vector<1x512xi1>
    %45 = vector.broadcast %44 : vector<1x512xi1> to vector<4x512xi1>
    %46 = vector.broadcast %cst_13 : f32 to vector<4x512xf32>
    %47 = arith.select %45, %41, %46 : vector<4x512xi1>, vector<4x512xf32>
    %48 = arith.truncf %47 : vector<4x512xf32> to vector<4x512xbf16>
    %49 = arith.truncf %3 : vector<4x512xf32> to vector<4x512xbf16>
    %c511_i32 = arith.constant 511 : i32
    %50 = tpu.dynamic_rotate %3 by %c511_i32 dim 1 : vector<4x512xf32>, i32 -> vector<4x512xf32>
    %c15_i32_14 = arith.constant 15 : i32
    %51 = vector.broadcast %c15_i32_14 : i32 to vector<1x512xi32>
    %52 = arith.cmpi slt, %6, %51 : vector<1x512xi32>
    %cst_15 = arith.constant 0.000000e+00 : f32
    %53 = vector.shape_cast %52 : vector<1x512xi1> to vector<1x512xi1>
    %54 = vector.broadcast %53 : vector<1x512xi1> to vector<4x512xi1>
    %55 = vector.broadcast %cst_15 : f32 to vector<4x512xf32>
    %56 = arith.select %54, %50, %55 : vector<4x512xi1>, vector<4x512xf32>
    %57 = arith.truncf %56 : vector<4x512xf32> to vector<4x512xbf16>
    %c497_i32 = arith.constant 497 : i32
    %58 = tpu.dynamic_rotate %3 by %c497_i32 dim 1 : vector<4x512xf32>, i32 -> vector<4x512xf32>
    %c15_i32_16 = arith.constant 15 : i32
    %59 = vector.broadcast %c15_i32_16 : i32 to vector<1x512xi32>
    %60 = arith.cmpi slt, %10, %59 : vector<1x512xi32>
    %c1_i32_17 = arith.constant 1 : i32
    %61 = vector.broadcast %c1_i32_17 : i32 to vector<1x512xi32>
    %62 = arith.cmpi sge, %6, %61 : vector<1x512xi32>
    %63 = arith.andi %60, %62 : vector<1x512xi1>
    %cst_18 = arith.constant 0.000000e+00 : f32
    %64 = vector.shape_cast %63 : vector<1x512xi1> to vector<1x512xi1>
    %65 = vector.broadcast %64 : vector<1x512xi1> to vector<4x512xi1>
    %66 = vector.broadcast %cst_18 : f32 to vector<4x512xf32>
    %67 = arith.select %65, %58, %66 : vector<4x512xi1>, vector<4x512xf32>
    %68 = arith.truncf %67 : vector<4x512xf32> to vector<4x512xbf16>
    %c496_i32 = arith.constant 496 : i32
    %69 = tpu.dynamic_rotate %3 by %c496_i32 dim 1 : vector<4x512xf32>, i32 -> vector<4x512xf32>
    %c15_i32_19 = arith.constant 15 : i32
    %70 = vector.broadcast %c15_i32_19 : i32 to vector<1x512xi32>
    %71 = arith.cmpi slt, %10, %70 : vector<1x512xi32>
    %cst_20 = arith.constant 0.000000e+00 : f32
    %72 = vector.shape_cast %71 : vector<1x512xi1> to vector<1x512xi1>
    %73 = vector.broadcast %72 : vector<1x512xi1> to vector<4x512xi1>
    %74 = vector.broadcast %cst_20 : f32 to vector<4x512xf32>
    %75 = arith.select %73, %69, %74 : vector<4x512xi1>, vector<4x512xf32>
    %76 = arith.truncf %75 : vector<4x512xf32> to vector<4x512xbf16>
    %c495_i32 = arith.constant 495 : i32
    %77 = tpu.dynamic_rotate %3 by %c495_i32 dim 1 : vector<4x512xf32>, i32 -> vector<4x512xf32>
    %c15_i32_21 = arith.constant 15 : i32
    %78 = vector.broadcast %c15_i32_21 : i32 to vector<1x512xi32>
    %79 = arith.cmpi slt, %10, %78 : vector<1x512xi32>
    %c15_i32_22 = arith.constant 15 : i32
    %80 = vector.broadcast %c15_i32_22 : i32 to vector<1x512xi32>
    %81 = arith.cmpi slt, %6, %80 : vector<1x512xi32>
    %82 = arith.andi %79, %81 : vector<1x512xi1>
    %cst_23 = arith.constant 0.000000e+00 : f32
    %83 = vector.shape_cast %82 : vector<1x512xi1> to vector<1x512xi1>
    %84 = vector.broadcast %83 : vector<1x512xi1> to vector<4x512xi1>
    %85 = vector.broadcast %cst_23 : f32 to vector<4x512xf32>
    %86 = arith.select %84, %77, %85 : vector<4x512xi1>, vector<4x512xf32>
    %87 = arith.truncf %86 : vector<4x512xf32> to vector<4x512xbf16>
    %88 = tpu.concatenate %21, %29, %40, %48, %49, %57, %68, %76, %87 in 0 : vector<4x512xbf16>, vector<4x512xbf16>, vector<4x512xbf16>, vector<4x512xbf16>, vector<4x512xbf16>, vector<4x512xbf16>, vector<4x512xbf16>, vector<4x512xbf16>, vector<4x512xbf16> -> vector<36x512xbf16>
    %c0_24 = arith.constant 0 : index
    %c0_25 = arith.constant 0 : index
    %89 = vector.load %arg2[%c0_24, %c0_25] : memref<8x36xbf16, #tpu.memory_space<vmem>>, vector<8x36xbf16>
    %cst_26 = arith.constant dense<0.000000e+00> : vector<8x512xf32>
    %90 = tpu.matmul %89, %88, %cst_26 {dimension_numbers = #tpu.dot_dimension_numbers<[1], [0], [0], [1], [0, 0, 1, 1], [], []>} : vector<8x36xbf16>, vector<36x512xbf16>, vector<8x512xf32> -> vector<8x512xf32>
    %c0_27 = arith.constant 0 : index
    %c0_28 = arith.constant 0 : index
    %91 = vector.load %arg3[%c0_27, %c0_28] : memref<8x8xf32, #tpu.memory_space<vmem>>, vector<8x8xf32>
    %92 = vector.extract_strided_slice %90 {offsets = [0, 0], sizes = [8, 256], strides = [1, 1]} : vector<8x512xf32> to vector<8x256xf32>
    %cst_29 = arith.constant dense<0.000000e+00> : vector<8xf32>
    %93 = vector.multi_reduction <add>, %92, %cst_29 [1] : vector<8x256xf32> to vector<8xf32>
    %94 = vector.shape_cast %93 : vector<8xf32> to vector<8x1xf32>
    %cst_30 = arith.constant dense<0.000000e+00> : vector<8x1xf32>
    %95 = tpu.matmul %91, %94, %cst_30 {dimension_numbers = #tpu.dot_dimension_numbers<[1], [0], [0], [1], [0, 0, 1, 1], [], []>} : vector<8x8xf32>, vector<8x1xf32>, vector<8x1xf32> -> vector<8x1xf32>
    %96 = vector.broadcast %95 : vector<8x1xf32> to vector<8x256xf32>
    %97 = arith.subf %92, %96 : vector<8x256xf32>
    %98 = arith.mulf %97, %97 : vector<8x256xf32>
    %cst_31 = arith.constant dense<0.000000e+00> : vector<8xf32>
    %99 = vector.multi_reduction <add>, %98, %cst_31 [1] : vector<8x256xf32> to vector<8xf32>
    %100 = vector.shape_cast %99 : vector<8xf32> to vector<8x1xf32>
    %cst_32 = arith.constant dense<0.000000e+00> : vector<8x1xf32>
    %101 = tpu.matmul %91, %100, %cst_32 {dimension_numbers = #tpu.dot_dimension_numbers<[1], [0], [0], [1], [0, 0, 1, 1], [], []>} : vector<8x8xf32>, vector<8x1xf32>, vector<8x1xf32> -> vector<8x1xf32>
    %cst_33 = arith.constant 9.99999974E-6 : f32
    %102 = vector.broadcast %cst_33 : f32 to vector<8x1xf32>
    %103 = arith.addf %101, %102 : vector<8x1xf32>
    %104 = math.rsqrt %103 : vector<8x1xf32>
    %105 = vector.broadcast %104 : vector<8x1xf32> to vector<8x256xf32>
    %106 = arith.mulf %97, %105 : vector<8x256xf32>
    %107 = vector.extract_strided_slice %90 {offsets = [0, 256], sizes = [8, 256], strides = [1, 1]} : vector<8x512xf32> to vector<8x256xf32>
    %cst_34 = arith.constant dense<0.000000e+00> : vector<8xf32>
    %108 = vector.multi_reduction <add>, %107, %cst_34 [1] : vector<8x256xf32> to vector<8xf32>
    %109 = vector.shape_cast %108 : vector<8xf32> to vector<8x1xf32>
    %cst_35 = arith.constant dense<0.000000e+00> : vector<8x1xf32>
    %110 = tpu.matmul %91, %109, %cst_35 {dimension_numbers = #tpu.dot_dimension_numbers<[1], [0], [0], [1], [0, 0, 1, 1], [], []>} : vector<8x8xf32>, vector<8x1xf32>, vector<8x1xf32> -> vector<8x1xf32>
    %111 = vector.broadcast %110 : vector<8x1xf32> to vector<8x256xf32>
    %112 = arith.subf %107, %111 : vector<8x256xf32>
    %113 = arith.mulf %112, %112 : vector<8x256xf32>
    %cst_36 = arith.constant dense<0.000000e+00> : vector<8xf32>
    %114 = vector.multi_reduction <add>, %113, %cst_36 [1] : vector<8x256xf32> to vector<8xf32>
    %115 = vector.shape_cast %114 : vector<8xf32> to vector<8x1xf32>
    %cst_37 = arith.constant dense<0.000000e+00> : vector<8x1xf32>
    %116 = tpu.matmul %91, %115, %cst_37 {dimension_numbers = #tpu.dot_dimension_numbers<[1], [0], [0], [1], [0, 0, 1, 1], [], []>} : vector<8x8xf32>, vector<8x1xf32>, vector<8x1xf32> -> vector<8x1xf32>
    %cst_38 = arith.constant 9.99999974E-6 : f32
    %117 = vector.broadcast %cst_38 : f32 to vector<8x1xf32>
    %118 = arith.addf %116, %117 : vector<8x1xf32>
    %119 = math.rsqrt %118 : vector<8x1xf32>
    %120 = vector.broadcast %119 : vector<8x1xf32> to vector<8x256xf32>
    %121 = arith.mulf %112, %120 : vector<8x256xf32>
    %122 = tpu.concatenate %106, %121 in 1 : vector<8x256xf32>, vector<8x256xf32> -> vector<8x512xf32>
    %c0_39 = arith.constant 0 : index
    %c0_40 = arith.constant 0 : index
    %c0_41 = arith.constant 0 : index
    %123 = vector.load %arg4[%c0_39, %c0_40, %c0_41] : memref<1x8x512xf32, #tpu.memory_space<vmem>>, vector<1x8x512xf32>
    %124 = vector.shape_cast %123 : vector<1x8x512xf32> to vector<8x512xf32>
    %125 = vector.shape_cast %122 : vector<8x512xf32> to vector<1x8x512xf32>
    tpu.vector_store %arg4[%c0_39, %c0_40, %c0_41], %125 {strides = array<i32>} : memref<1x8x512xf32, #tpu.memory_space<vmem>>, vector<1x8x512xf32>,
    return
  }
  func.func @transform_0(%arg0: i32) -> (i32, i32, i32) {
    %c0_i32 = arith.constant 0 : i32
    %c0_i32_0 = arith.constant 0 : i32
    %c0_i32_1 = arith.constant 0 : i32
    return %arg0, %c0_i32, %c0_i32_0 : i32, i32, i32
  }
  func.func @transform_1(%arg0: i32) -> (i32, i32) {
    %c0_i32 = arith.constant 0 : i32
    %c0_i32_0 = arith.constant 0 : i32
    %c0_i32_1 = arith.constant 0 : i32
    return %c0_i32, %c0_i32_0 : i32, i32
  }
  func.func @transform_2(%arg0: i32) -> (i32, i32) {
    %c0_i32 = arith.constant 0 : i32
    %c0_i32_0 = arith.constant 0 : i32
    %c0_i32_1 = arith.constant 0 : i32
    return %c0_i32, %c0_i32_0 : i32, i32
  }
  func.func @transform_3(%arg0: i32) -> (i32, i32, i32) {
    %c0_i32 = arith.constant 0 : i32
    %c0_i32_0 = arith.constant 0 : i32
    %c0_i32_1 = arith.constant 0 : i32
    return %arg0, %c0_i32, %c0_i32_0 : i32, i32, i32
  }
}

</mosaic_0001>

<llo_original>
// kernel: tpu_custom_call.1
$region0: #{tpu_custom_call.1}
  #allocation0 [shape = 'u32[]', space=smem, size = 0x4, offset = 0x4, fixed_abs, tag = 'smem constant byte address 0x4 - core index']
  #allocation1 [shape = 'u32[144,128]{1,0:T(1,128)}', space=vmem, size = 0x12000, scoped, tag = 'internal scratch']
  %s0 = inlined_call_operand.hbm [shape: f32[1,4,512], index: 0, kind: input, shape index: {}]
  %s1 = inlined_call_operand.hbm [shape: bf16[8,36], index: 1, kind: input, shape index: {}]
  %s2 = inlined_call_operand.hbm [shape: f32[8,8], index: 2, kind: input, shape index: {}]
  %s3 = inlined_call_operand.hbm [shape: f32[1,8,512], index: 3, kind: output, shape index: {}]
  %s4 = sld [smem:[#allocation0]]
  $region34: #{tpu_custom_call.1} parent=0
    _
  %s6 = ssub.s32 1, %s4
  %s7 = scalar_select 0, %s6, %s4
  $region1: #{tpu_custom_call.1} parent=0
    #allocation2 [shape = 'u8[8192]{0}', space=vmem, size = 0x2000, scoped, tag = 'input window, operand 0, single buffered']
    #allocation3 [shape = 's32[1]{0}', space=sflag, size = 0x4, scoped, tag = 'scoped memory for tpu_custom_call.1']
    #allocation4 [shape = 's32[1]{0}', space=sflag, size = 0x4, scoped, tag = 'scoped memory for tpu_custom_call.1']
    #allocation5 [shape = 'u8[2048]{0}', space=vmem, size = 0x800, scoped, tag = 'input window, operand 1, single buffered']
    #allocation6 [shape = 's32[1]{0}', space=sflag, size = 0x4, scoped, tag = 'scoped memory for tpu_custom_call.1']
    #allocation7 [shape = 'u8[4096]{0}', space=vmem, size = 0x1000, scoped, tag = 'input window, operand 2, single buffered']
    #allocation8 [shape = 'u8[16384]{0}', space=vmem, size = 0x4000, scoped, tag = 'output window, operand 0, single buffered']
    %8 = vsyncpa [#allocation3], 0
    %9 = vsyncpa [#allocation6], 0
    %10 = vsyncpa [#allocation4], 0
    // Predicated region
    $region2: #{tpu_custom_call.1} parent=1 // pred_check
      _
    $region3: #{tpu_custom_call.1} parent=1 // pred_check_branch
      %12 = sbr.rel (0) target = $region5
    $region4: #{tpu_custom_call.1} parent=1 // pred_region
      %s14 = ssub.s32 256, 256
      %15 = vsyncadd [#allocation3], %s14
      %s17 = sshll.u32 [#allocation2], 4
      %s18 = int_to_ptr.vmem [resolvable:$true] %s17
      %20 = dma.hbm_to_vmem [thread:$0]  %s0, 256, %s18, [#allocation3]
    $region5: #{tpu_custom_call.1} parent=1 // pred_fallthru
      _
    // Predicated region
    $region6: #{tpu_custom_call.1} parent=1 // pred_check
      _
    $region7: #{tpu_custom_call.1} parent=1 // pred_check_branch
      %22 = sbr.rel (0) target = $region9
    $region8: #{tpu_custom_call.1} parent=1 // pred_region
      %s24 = ssub.s32 64, 64
      %25 = vsyncadd [#allocation6], %s24
      %s27 = sshll.u32 [#allocation5], 4
      %s28 = int_to_ptr.vmem [resolvable:$true] %s27
      %30 = dma.hbm_to_vmem [thread:$0]  %s1, 64, %s28, [#allocation6]
    $region9: #{tpu_custom_call.1} parent=1 // pred_fallthru
      _
    // Predicated region
    $region10: #{tpu_custom_call.1} parent=1 // pred_check
      _
    $region11: #{tpu_custom_call.1} parent=1 // pred_check_branch
      %32 = sbr.rel (0) target = $region13
    $region12: #{tpu_custom_call.1} parent=1 // pred_region
      %s34 = ssub.s32 128, 128
      %35 = vsyncadd [#allocation6], %s34
      %s37 = sshll.u32 [#allocation7], 4
      %s38 = int_to_ptr.vmem [resolvable:$true] %s37
      %40 = dma.hbm_to_vmem [thread:$0]  %s2, 128, %s38, [#allocation6]
    $region13: #{tpu_custom_call.1} parent=1 // pred_fallthru
      _
    // Predicated region
    $region14: #{tpu_custom_call.1} parent=1 // pred_check
      _
    $region15: #{tpu_custom_call.1} parent=1 // pred_check_branch
      %42 = sbr.rel (0) target = $region17
    $region16: #{tpu_custom_call.1} parent=1 // pred_region
      %43 = dma.done [#allocation3], 256
    $region17: #{tpu_custom_call.1} parent=1 // pred_fallthru
      _
    // Predicated region
    $region18: #{tpu_custom_call.1} parent=1 // pred_check
      _
    $region19: #{tpu_custom_call.1} parent=1 // pred_check_branch
      %45 = sbr.rel (0) target = $region21
    $region20: #{tpu_custom_call.1} parent=1 // pred_region
      %46 = dma.done [#allocation6], 64
    $region21: #{tpu_custom_call.1} parent=1 // pred_fallthru
      _
    // Predicated region
    $region22: #{tpu_custom_call.1} parent=1 // pred_check
      _
    $region23: #{tpu_custom_call.1} parent=1 // pred_check_branch
      %48 = sbr.rel (0) target = $region25
    $region24: #{tpu_custom_call.1} parent=1 // pred_region
      %49 = dma.done [#allocation6], 128
    $region25: #{tpu_custom_call.1} parent=1 // pred_fallthru
      _
    %v51 = vld [vmem:[#allocation2] sm:$0xff]
    %v52 = vld [vmem:[#allocation2 + $0x8] sm:$0xff]
    %v53 = vmax.f32 %v51, 0.0
    %v54 = vmax.f32 %v52, 0.0
    %v55 = vlaneseq
    %v56 = vand.u32 %v55, 127
    %v57 = vadd.s32 %v56, 128
    %v58 = vadd.s32 %v56, 256
    %v59 = vadd.s32 %v56, 384
    %v60 = vand.u32 %v56, 15
    %v61 = vand.u32 %v57, 15
    %v62 = vand.u32 %v58, 15
    %v63 = vand.u32 %v59, 15
    %v64 = vshra.s32 %v56, 4
    %v65 = vshra.s32 %v57, 4
    %v66 = vshra.s32 %v58, 4
    %v67 = vshra.s32 %v59, 4
    %v68 = vand.u32 %v64, 15
    %v69 = vand.u32 %v65, 15
    %v70 = vand.u32 %v66, 15
    %v71 = vand.u32 %v67, 15
    %v74 = vcombine.high %v53, %v53
    %v75 = vcombine.high %v54, %v54
    %78 = vrot.lane.b32.xlu0 %v53, 17
    %v79 = vpop.permute.xlu0 %78
    %80 = vrot.lane.b32.xlu0 %v74, 17
    %v81 = vpop.permute.xlu0 %80
    %82 = vrot.lane.b32.xlu0 %v54, 17
    %v83 = vpop.permute.xlu0 %82
    %84 = vrot.lane.b32.xlu0 %v75, 17
    %v85 = vpop.permute.xlu0 %84
    %vm86 = vcmp.lt.s32.totalorder %v56, 17
    %v87 = vsel %vm86, %v83, %v85
    %v88 = vsel %vm86, %v81, %v83
    %v89 = vsel %vm86, %v79, %v81
    %v90 = vsel %vm86, %v85, %v79
    %vm91 = vcmp.ge.s32.totalorder %v68, 1
    %vm92 = vcmp.ge.s32.totalorder %v69, 1
    %vm93 = vcmp.ge.s32.totalorder %v70, 1
    %vm94 = vcmp.ge.s32.totalorder %v71, 1
    %vm95 = vcmp.ge.s32.totalorder %v60, 1
    %vm96 = vcmp.ge.s32.totalorder %v61, 1
    %vm97 = vcmp.ge.s32.totalorder %v62, 1
    %vm98 = vcmp.ge.s32.totalorder %v63, 1
    %vm99 = vmand %vm91, %vm95
    %vm100 = vmand %vm92, %vm96
    %vm101 = vmand %vm93, %vm97
    %vm102 = vmand %vm94, %vm98
    %v103 = vsel %vm99, 1, 0
    %v104 = vsel %vm100, 1, 0
    %v105 = vsel %vm101, 1, 0
    %v106 = vsel %vm102, 1, 0
    %vm107 = vcmp.eq.s32.totalorder %v103, 1
    %vm108 = vcmp.eq.s32.totalorder %v104, 1
    %vm109 = vcmp.eq.s32.totalorder %v105, 1
    %vm110 = vcmp.eq.s32.totalorder %v106, 1
    %v111 = vsel %vm107, %v90, 0.0
    %v112 = vsel %vm108, %v89, 0.0
    %v113 = vsel %vm109, %v88, 0.0
    %v114 = vsel %vm110, %v87, 0.0
    %v115 = vpack.c.bf16 %v111, %v111
    %v116 = vpack.c.bf16 %v112, %v112
    %v117 = vpack.c.bf16 %v113, %v113
    %v118 = vpack.c.bf16 %v114, %v114
    %119 = vrot.lane.b32.xlu0 %v53, 16
    %v120 = vpop.permute.xlu0 %119
    %121 = vrot.lane.b32.xlu0 %v74, 16
    %v122 = vpop.permute.xlu0 %121
    %123 = vrot.lane.b32.xlu0 %v54, 16
    %v124 = vpop.permute.xlu0 %123
    %125 = vrot.lane.b32.xlu0 %v75, 16
    %v126 = vpop.permute.xlu0 %125
    %vm127 = vcmp.lt.s32.totalorder %v56, 16
    %v128 = vsel %vm127, %v124, %v126
    %v129 = vsel %vm127, %v122, %v124
    %v130 = vsel %vm127, %v120, %v122
    %v131 = vsel %vm127, %v126, %v120
    %v132 = vsel %vm91, 1, 0
    %v133 = vsel %vm92, 1, 0
    %v134 = vsel %vm93, 1, 0
    %v135 = vsel %vm94, 1, 0
    %vm136 = vcmp.eq.s32.totalorder %v132, 1
    %vm137 = vcmp.eq.s32.totalorder %v133, 1
    %vm138 = vcmp.eq.s32.totalorder %v134, 1
    %vm139 = vcmp.eq.s32.totalorder %v135, 1
    %v140 = vsel %vm136, %v131, 0.0
    %v141 = vsel %vm137, %v130, 0.0
    %v142 = vsel %vm138, %v129, 0.0
    %v143 = vsel %vm139, %v128, 0.0
    %v144 = vpack.c.bf16 %v140, %v140
    %v145 = vpack.c.bf16 %v141, %v141
    %v146 = vpack.c.bf16 %v142, %v142
    %v147 = vpack.c.bf16 %v143, %v143
    %148 = vrot.lane.b32.xlu0 %v53, 15
    %v149 = vpop.permute.xlu0 %148
    %150 = vrot.lane.b32.xlu0 %v74, 15
    %v151 = vpop.permute.xlu0 %150
    %152 = vrot.lane.b32.xlu0 %v54, 15
    %v153 = vpop.permute.xlu0 %152
    %154 = vrot.lane.b32.xlu0 %v75, 15
    %v155 = vpop.permute.xlu0 %154
    %vm156 = vcmp.lt.s32.totalorder %v56, 15
    %v157 = vsel %vm156, %v153, %v155
    %v158 = vsel %vm156, %v151, %v153
    %v159 = vsel %vm156, %v149, %v151
    %v160 = vsel %vm156, %v155, %v149
    %vm161 = vcmp.lt.s32.totalorder %v60, 15
    %vm162 = vcmp.lt.s32.totalorder %v61, 15
    %vm163 = vcmp.lt.s32.totalorder %v62, 15
    %vm164 = vcmp.lt.s32.totalorder %v63, 15
    %vm165 = vmand %vm91, %vm161
    %vm166 = vmand %vm92, %vm162
    %vm167 = vmand %vm93, %vm163
    %vm168 = vmand %vm94, %vm164
    %v169 = vsel %vm165, 1, 0
    %v170 = vsel %vm166, 1, 0
    %v171 = vsel %vm167, 1, 0
    %v172 = vsel %vm168, 1, 0
    %vm173 = vcmp.eq.s32.totalorder %v169, 1
    %vm174 = vcmp.eq.s32.totalorder %v170, 1
    %vm175 = vcmp.eq.s32.totalorder %v171, 1
    %vm176 = vcmp.eq.s32.totalorder %v172, 1
    %v177 = vsel %vm173, %v160, 0.0
    %v178 = vsel %vm174, %v159, 0.0
    %v179 = vsel %vm175, %v158, 0.0
    %v180 = vsel %vm176, %v157, 0.0
    %v181 = vpack.c.bf16 %v177, %v177
    %v182 = vpack.c.bf16 %v178, %v178
    %v183 = vpack.c.bf16 %v179, %v179
    %v184 = vpack.c.bf16 %v180, %v180
    %185 = vrot.lane.b32.xlu0 %v53, 1
    %v186 = vpop.permute.xlu0 %185
    %187 = vrot.lane.b32.xlu0 %v74, 1
    %v188 = vpop.permute.xlu0 %187
    %189 = vrot.lane.b32.xlu0 %v54, 1
    %v190 = vpop.permute.xlu0 %189
    %191 = vrot.lane.b32.xlu0 %v75, 1
    %v192 = vpop.permute.xlu0 %191
    %vm193 = vcmp.lt.s32.totalorder %v56, 1
    %v194 = vsel %vm193, %v190, %v192
    %v195 = vsel %vm193, %v188, %v190
    %v196 = vsel %vm193, %v186, %v188
    %v197 = vsel %vm193, %v192, %v186
    %v198 = vsel %vm95, 1, 0
    %v199 = vsel %vm96, 1, 0
    %v200 = vsel %vm97, 1, 0
    %v201 = vsel %vm98, 1, 0
    %vm202 = vcmp.eq.s32.totalorder %v198, 1
    %vm203 = vcmp.eq.s32.totalorder %v199, 1
    %vm204 = vcmp.eq.s32.totalorder %v200, 1
    %vm205 = vcmp.eq.s32.totalorder %v201, 1
    %v206 = vsel %vm202, %v197, 0.0
    %v207 = vsel %vm203, %v196, 0.0
    %v208 = vsel %vm204, %v195, 0.0
    %v209 = vsel %vm205, %v194, 0.0
    %v210 = vpack.c.bf16 %v206, %v206
    %v211 = vpack.c.bf16 %v207, %v207
    %v212 = vpack.c.bf16 %v208, %v208
    %v213 = vpack.c.bf16 %v209, %v209
    %v214 = vpack.c.bf16 %v53, %v53
    %v215 = vpack.c.bf16 %v74, %v74
    %v216 = vpack.c.bf16 %v54, %v54
    %v217 = vpack.c.bf16 %v75, %v75
    %218 = vrot.lane.b32.xlu0 %v53, 127
    %v219 = vpop.permute.xlu0 %218
    %220 = vrot.lane.b32.xlu0 %v74, 127
    %v221 = vpop.permute.xlu0 %220
    %222 = vrot.lane.b32.xlu0 %v54, 127
    %v223 = vpop.permute.xlu0 %222
    %224 = vrot.lane.b32.xlu0 %v75, 127
    %v225 = vpop.permute.xlu0 %224
    %vm226 = vcmp.lt.s32.totalorder %v56, 127
    %v227 = vsel %vm226, %v223, %v225
    %v228 = vsel %vm226, %v221, %v223
    %v229 = vsel %vm226, %v219, %v221
    %v230 = vsel %vm226, %v225, %v219
    %v231 = vsel %vm161, 1, 0
    %v232 = vsel %vm162, 1, 0
    %v233 = vsel %vm163, 1, 0
    %v234 = vsel %vm164, 1, 0
    %vm235 = vcmp.eq.s32.totalorder %v231, 1
    %vm236 = vcmp.eq.s32.totalorder %v232, 1
    %vm237 = vcmp.eq.s32.totalorder %v233, 1
    %vm238 = vcmp.eq.s32.totalorder %v234, 1
    %v239 = vsel %vm235, %v229, 0.0
    %v240 = vsel %vm236, %v228, 0.0
    %v241 = vsel %vm237, %v227, 0.0
    %v242 = vsel %vm238, %v230, 0.0
    %v243 = vpack.c.bf16 %v239, %v239
    %v244 = vpack.c.bf16 %v240, %v240
    %v245 = vpack.c.bf16 %v241, %v241
    %v246 = vpack.c.bf16 %v242, %v242
    %247 = vrot.lane.b32.xlu0 %v53, 113
    %v248 = vpop.permute.xlu0 %247
    %249 = vrot.lane.b32.xlu0 %v74, 113
    %v250 = vpop.permute.xlu0 %249
    %251 = vrot.lane.b32.xlu0 %v54, 113
    %v252 = vpop.permute.xlu0 %251
    %253 = vrot.lane.b32.xlu0 %v75, 113
    %v254 = vpop.permute.xlu0 %253
    %vm255 = vcmp.lt.s32.totalorder %v56, 113
    %v256 = vsel %vm255, %v252, %v254
    %v257 = vsel %vm255, %v250, %v252
    %v258 = vsel %vm255, %v248, %v250
    %v259 = vsel %vm255, %v254, %v248
    %vm260 = vcmp.lt.s32.totalorder %v68, 15
    %vm261 = vcmp.lt.s32.totalorder %v69, 15
    %vm262 = vcmp.lt.s32.totalorder %v70, 15
    %vm263 = vcmp.lt.s32.totalorder %v71, 15
    %vm264 = vmand %vm260, %vm95
    %vm265 = vmand %vm261, %vm96
    %vm266 = vmand %vm262, %vm97
    %vm267 = vmand %vm263, %vm98
    %v268 = vsel %vm264, 1, 0
    %v269 = vsel %vm265, 1, 0
    %v270 = vsel %vm266, 1, 0
    %v271 = vsel %vm267, 1, 0
    %vm272 = vcmp.eq.s32.totalorder %v268, 1
    %vm273 = vcmp.eq.s32.totalorder %v269, 1
    %vm274 = vcmp.eq.s32.totalorder %v270, 1
    %vm275 = vcmp.eq.s32.totalorder %v271, 1
    %v276 = vsel %vm272, %v258, 0.0
    %v277 = vsel %vm273, %v257, 0.0
    %v278 = vsel %vm274, %v256, 0.0
    %v279 = vsel %vm275, %v259, 0.0
    %v280 = vpack.c.bf16 %v276, %v276
    %v281 = vpack.c.bf16 %v277, %v277
    %v282 = vpack.c.bf16 %v278, %v278
    %v283 = vpack.c.bf16 %v279, %v279
    %284 = vrot.lane.b32.xlu0 %v53, 112
    %v285 = vpop.permute.xlu0 %284
    %286 = vrot.lane.b32.xlu0 %v74, 112
    %v287 = vpop.permute.xlu0 %286
    %288 = vrot.lane.b32.xlu0 %v54, 112
    %v289 = vpop.permute.xlu0 %288
    %290 = vrot.lane.b32.xlu0 %v75, 112
    %v291 = vpop.permute.xlu0 %290
    %vm292 = vcmp.lt.s32.totalorder %v56, 112
    %v293 = vsel %vm292, %v289, %v291
    %v294 = vsel %vm292, %v287, %v289
    %v295 = vsel %vm292, %v285, %v287
    %v296 = vsel %vm292, %v291, %v285
    %v297 = vsel %vm260, 1, 0
    %v298 = vsel %vm261, 1, 0
    %v299 = vsel %vm262, 1, 0
    %v300 = vsel %vm263, 1, 0
    %vm301 = vcmp.eq.s32.totalorder %v297, 1
    %vm302 = vcmp.eq.s32.totalorder %v298, 1
    %vm303 = vcmp.eq.s32.totalorder %v299, 1
    %vm304 = vcmp.eq.s32.totalorder %v300, 1
    %v305 = vsel %vm301, %v295, 0.0
    %v306 = vsel %vm302, %v294, 0.0
    %v307 = vsel %vm303, %v293, 0.0
    %v308 = vsel %vm304, %v296, 0.0
    %v309 = vpack.c.bf16 %v305, %v305
    %v310 = vpack.c.bf16 %v306, %v306
    %v311 = vpack.c.bf16 %v307, %v307
    %v312 = vpack.c.bf16 %v308, %v308
    %313 = vrot.lane.b32.xlu0 %v53, 111
    %v314 = vpop.permute.xlu0 %313
    %315 = vrot.lane.b32.xlu0 %v74, 111
    %v316 = vpop.permute.xlu0 %315
    %317 = vrot.lane.b32.xlu0 %v54, 111
    %v318 = vpop.permute.xlu0 %317
    %319 = vrot.lane.b32.xlu0 %v75, 111
    %v320 = vpop.permute.xlu0 %319
    %vm321 = vcmp.lt.s32.totalorder %v56, 111
    %v322 = vsel %vm321, %v318, %v320
    %v323 = vsel %vm321, %v316, %v318
    %v324 = vsel %vm321, %v314, %v316
    %v325 = vsel %vm321, %v320, %v314
    %vm326 = vmand %vm260, %vm161
    %vm327 = vmand %vm261, %vm162
    %vm328 = vmand %vm262, %vm163
    %vm329 = vmand %vm263, %vm164
    %v330 = vsel %vm326, 1, 0
    %v331 = vsel %vm327, 1, 0
    %v332 = vsel %vm328, 1, 0
    %v333 = vsel %vm329, 1, 0
    %vm334 = vcmp.eq.s32.totalorder %v330, 1
    %vm335 = vcmp.eq.s32.totalorder %v331, 1
    %vm336 = vcmp.eq.s32.totalorder %v332, 1
    %vm337 = vcmp.eq.s32.totalorder %v333, 1
    %v338 = vsel %vm334, %v324, 0.0
    %v339 = vsel %vm335, %v323, 0.0
    %v340 = vsel %vm336, %v322, 0.0
    %v341 = vsel %vm337, %v325, 0.0
    %v342 = vpack.c.bf16 %v338, %v338
    %v343 = vpack.c.bf16 %v339, %v339
    %v344 = vpack.c.bf16 %v340, %v340
    %v345 = vpack.c.bf16 %v341, %v341
    %v350 = vrot.slane %v144, 6
    %v351 = vrot.slane %v145, 6
    %v352 = vrot.slane %v146, 6
    %v353 = vrot.slane %v147, 6
    %v358 = vrot.slane %v181, 4
    %v359 = vrot.slane %v182, 4
    %v360 = vrot.slane %v183, 4
    %v361 = vrot.slane %v184, 4
    %v366 = vrot.slane %v210, 2
    %v367 = vrot.slane %v211, 2
    %v368 = vrot.slane %v212, 2
    %v369 = vrot.slane %v213, 2
    %v374 = vrot.slane %v243, 6
    %v375 = vrot.slane %v244, 6
    %v376 = vrot.slane %v245, 6
    %v377 = vrot.slane %v246, 6
    %v382 = vrot.slane %v280, 4
    %v383 = vrot.slane %v281, 4
    %v384 = vrot.slane %v282, 4
    %v385 = vrot.slane %v283, 4
    %v390 = vrot.slane %v309, 2
    %v391 = vrot.slane %v310, 2
    %v392 = vrot.slane %v311, 2
    %v393 = vrot.slane %v312, 2
    %vm394 = vcmask 1041408
    %v397 = vsel %vm394, %v115, %v350
    %v400 = vsel %vm394, %v116, %v351
    %v403 = vsel %vm394, %v117, %v352
    %v406 = vsel %vm394, %v118, %v353
    %vm407 = vcmask 1043456
    %v409 = vsel %vm407, %v397, %v358
    %v411 = vsel %vm407, %v400, %v359
    %v413 = vsel %vm407, %v403, %v360
    %v415 = vsel %vm407, %v406, %v361
    %vm416 = vcmask 1045504
    %v418 = vsel %vm416, %v409, %v366
    %v421 = vsel %vm416, %v411, %v367
    %v424 = vsel %vm416, %v413, %v368
    %v427 = vsel %vm416, %v415, %v369
    %v431 = vsel %vm394, %v214, %v374
    %v434 = vsel %vm394, %v215, %v375
    %v437 = vsel %vm394, %v216, %v376
    %v440 = vsel %vm394, %v217, %v377
    %v442 = vsel %vm407, %v431, %v382
    %v444 = vsel %vm407, %v434, %v383
    %v446 = vsel %vm407, %v437, %v384
    %v448 = vsel %vm407, %v440, %v385
    %v450 = vsel %vm416, %v442, %v390
    %v453 = vsel %vm416, %v444, %v391
    %v456 = vsel %vm416, %v446, %v392
    %v459 = vsel %vm416, %v448, %v393
    %v461 = vld [vmem:[#allocation5] sm:$0xf]
    %vm462 = vcmask 293888
    %v464 = vsel %vm462, %v461, 0
    %v467 = vsel %vm394, %v342, 0
    %v470 = vsel %vm394, %v343, 0
    %v473 = vsel %vm394, %v344, 0
    %v476 = vsel %vm394, %v345, 0
    %478 = vmatprep.subr.bf16.mxu0 %v421
    %479 = vmatpush1.bf16.msra.mxu0 %v418
    %480 = vmatprep.subr.bf16.mxu0 %v453
    %481 = vmatpush1.bf16.msra.mxu0 %v450
    %482 = vmatprep.subr.bf16.mxu0 %v470
    %483 = vmatpush1.bf16.msra.mxu0 %v467
    %484 = vmatprep.subr.bf16.mxu0 0
    %485 = vmatpush1.bf16.msra.mxu0 0
    %486 = vmatprep.subr.bf16.mxu0 0
    %487 = vmatpush1.bf16.msra.mxu0 0
    %488 = vmatprep.subr.bf16.mxu0 0
    %489 = vmatpush1.bf16.msra.mxu0 0
    %490 = vmatprep.subr.bf16.mxu0 0
    %491 = vmatpush1.bf16.msra.mxu0 0
    %492 = vmatprep.subr.bf16.mxu0 0
    %493 = vmatpush1.bf16.msra.mxu0 0
    %494 = vmatprep.subr.bf16.mxu0 0
    %495 = vmatpush1.bf16.msra.mxu0 0
    %496 = vmatprep.subr.bf16.mxu0 0
    %497 = vmatpush1.bf16.msra.mxu0 0
    %498 = vmatprep.subr.bf16.mxu0 0
    %499 = vmatpush1.bf16.msra.mxu0 0
    %500 = vmatprep.subr.bf16.mxu0 0
    %501 = vmatpush1.bf16.msra.mxu0 0
    %502 = vmatprep.subr.bf16.mxu0 0
    %503 = vmatpush1.bf16.msra.mxu0 0
    %504 = vmatprep.subr.bf16.mxu0 0
    %505 = vmatpush1.bf16.msra.mxu0 0
    %506 = vmatprep.subr.bf16.mxu0 0
    %507 = vmatpush1.bf16.msra.mxu0 0
    %508 = vmatprep.subr.bf16.mxu0 0
    %509 = vmatpush1.bf16.msra.mxu0 0
    %510 = vmatprep.mubr.bf16.mxu0 0
    %511 = vmatmul.mubr.bf16.gmra.mrb[0].mxu0 %v464
    %v512 = vpop.f32.mrb[0].mxu0
    %v513 = vadd.f32 0.0, %v512
    %v514 = vpop.f32.mrb[0].mxu0
    %v515 = vadd.f32 0.0, %v514
    %v516 = vpop.f32.mrb[0].mxu0
    %v517 = vpop.f32.mrb[0].mxu0
    %518 = vdwg.mxu0
    %519 = vmatprep.subr.bf16.mxu0 %v427
    %520 = vmatpush1.bf16.msra.mxu0 %v424
    %521 = vmatprep.subr.bf16.mxu0 %v459
    %522 = vmatpush1.bf16.msra.mxu0 %v456
    %523 = vmatprep.subr.bf16.mxu0 %v476
    %524 = vmatpush1.bf16.msra.mxu0 %v473
    %525 = vmatprep.subr.bf16.mxu0 0
    %526 = vmatpush1.bf16.msra.mxu0 0
    %527 = vmatprep.subr.bf16.mxu0 0
    %528 = vmatpush1.bf16.msra.mxu0 0
    %529 = vmatprep.subr.bf16.mxu0 0
    %530 = vmatpush1.bf16.msra.mxu0 0
    %531 = vmatprep.subr.bf16.mxu0 0
    %532 = vmatpush1.bf16.msra.mxu0 0
    %533 = vmatprep.subr.bf16.mxu0 0
    %534 = vmatpush1.bf16.msra.mxu0 0
    %535 = vmatprep.subr.bf16.mxu0 0
    %536 = vmatpush1.bf16.msra.mxu0 0
    %537 = vmatprep.subr.bf16.mxu0 0
    %538 = vmatpush1.bf16.msra.mxu0 0
    %539 = vmatprep.subr.bf16.mxu0 0
    %540 = vmatpush1.bf16.msra.mxu0 0
    %541 = vmatprep.subr.bf16.mxu0 0
    %542 = vmatpush1.bf16.msra.mxu0 0
    %543 = vmatprep.subr.bf16.mxu0 0
    %544 = vmatpush1.bf16.msra.mxu0 0
    %545 = vmatprep.subr.bf16.mxu0 0
    %546 = vmatpush1.bf16.msra.mxu0 0
    %547 = vmatprep.subr.bf16.mxu0 0
    %548 = vmatpush1.bf16.msra.mxu0 0
    %549 = vmatprep.subr.bf16.mxu0 0
    %550 = vmatpush1.bf16.msra.mxu0 0
    %551 = vmatprep.mubr.bf16.mxu0 0
    %552 = vmatmul.mubr.bf16.gmra.mrb[0].mxu0 %v464
    %v553 = vpop.f32.mrb[0].mxu0
    %v554 = vadd.f32 0.0, %v553
    %v555 = vpop.f32.mrb[0].mxu0
    %v556 = vadd.f32 0.0, %v555
    %v557 = vpop.f32.mrb[0].mxu0
    %v558 = vpop.f32.mrb[0].mxu0
    %559 = vdwg.mxu0
    %v560 = vld [vmem:[#allocation7] sm:$0xff]
    %v561 = vadd.f32 %v513, %v515
    %562 = vadd.xlane.f32.xlu0 %v561
    %v563 = vpop.xlane.xlu0 %562
    %vm564 = vcmask 64512
    %v566 = vsel %vm564, %v560, 0
    %568 = vmatprep.subr.mxu0 0.0
    %569 = vmatpush1.msra.mxu0 %v563
    %570 = vmatprep.subr.mxu0 0.0
    %571 = vmatpush1.msra.mxu0 0.0
    %572 = vmatprep.subr.mxu0 0.0
    %573 = vmatpush1.msra.mxu0 0.0
    %574 = vmatprep.subr.mxu0 0.0
    %575 = vmatpush1.msra.mxu0 0.0
    %576 = vmatprep.subr.mxu0 0.0
    %577 = vmatpush1.msra.mxu0 0.0
    %578 = vmatprep.subr.mxu0 0.0
    %579 = vmatpush1.msra.mxu0 0.0
    %580 = vmatprep.subr.mxu0 0.0
    %581 = vmatpush1.msra.mxu0 0.0
    %582 = vmatprep.subr.mxu0 0.0
    %583 = vmatpush1.msra.mxu0 0.0
    %584 = vmatprep.subr.mxu0 0.0
    %585 = vmatpush1.msra.mxu0 0.0
    %586 = vmatprep.subr.mxu0 0.0
    %587 = vmatpush1.msra.mxu0 0.0
    %588 = vmatprep.subr.mxu0 0.0
    %589 = vmatpush1.msra.mxu0 0.0
    %590 = vmatprep.subr.mxu0 0.0
    %591 = vmatpush1.msra.mxu0 0.0
    %592 = vmatprep.subr.mxu0 0.0
    %593 = vmatpush1.msra.mxu0 0.0
    %594 = vmatprep.subr.mxu0 0.0
    %595 = vmatpush1.msra.mxu0 0.0
    %596 = vmatprep.subr.mxu0 0.0
    %597 = vmatpush1.msra.mxu0 0.0
    %598 = vmatprep.subr.mxu0 0.0
    %599 = vmatpush1.msra.mxu0 0.0
    %600 = vmatprep.subr.mxu0 0.0
    %601 = vmatpush1.msra.mxu0 0.0
    %602 = vmatprep.subr.mxu0 0.0
    %603 = vmatpush1.msra.mxu0 0.0
    %604 = vmatprep.subr.mxu0 0.0
    %605 = vmatpush1.msra.mxu0 0.0
    %606 = vmatprep.subr.mxu0 0.0
    %607 = vmatpush1.msra.mxu0 0.0
    %608 = vmatprep.subr.mxu0 0.0
    %609 = vmatpush1.msra.mxu0 0.0
    %610 = vmatprep.subr.mxu0 0.0
    %611 = vmatpush1.msra.mxu0 0.0
    %612 = vmatprep.subr.mxu0 0.0
    %613 = vmatpush1.msra.mxu0 0.0
    %614 = vmatprep.subr.mxu0 0.0
    %615 = vmatpush1.msra.mxu0 0.0
    %616 = vmatprep.subr.mxu0 0.0
    %617 = vmatpush1.msra.mxu0 0.0
    %618 = vmatprep.subr.mxu0 0.0
    %619 = vmatpush1.msra.mxu0 0.0
    %620 = vmatprep.subr.mxu0 0.0
    %621 = vmatpush1.msra.mxu0 0.0
    %622 = vmatprep.subr.mxu0 0.0
    %623 = vmatpush1.msra.mxu0 0.0
    %624 = vmatprep.subr.mxu0 0.0
    %625 = vmatpush1.msra.mxu0 0.0
    %626 = vmatprep.subr.mxu0 0.0
    %627 = vmatpush1.msra.mxu0 0.0
    %628 = vmatprep.subr.mxu0 0.0
    %629 = vmatpush1.msra.mxu0 0.0
    %630 = vmatprep.subr.mxu0 0.0
    %631 = vmatpush1.msra.mxu0 0.0
    %632 = vmatprep.mubr.f32.mxu0 0.0
    %633 = vmatmul.mubr.f32.gmra.mrb[0].mxu0 %v566
    %v634 = vpop.f32.mrb[0].mxu0
    %v635 = vadd.f32 0.0, %v634
    %v636 = vpop.f32.mrb[0].mxu0
    %637 = vdwg.mxu0
    %639 = vset.pattern.permute.xlu0 0
    %640 = vperm.xlu0 %639, %v635
    %v641 = vpop.permute.xlu0 %640
    %v643 = vsub.f32 %v513, %v641
    %v644 = vsub.f32 %v515, %v641
    %v645 = vmul.f32 %v643, %v643
    %v646 = vmul.f32 %v644, %v644
    %v647 = vadd.f32 %v645, %v646
    %648 = vadd.xlane.f32.xlu0 %v647
    %v649 = vpop.xlane.xlu0 %648
    %650 = vmatprep.subr.mxu0 0.0
    %651 = vmatpush1.msra.mxu0 %v649
    %652 = vmatprep.subr.mxu0 0.0
    %653 = vmatpush1.msra.mxu0 0.0
    %654 = vmatprep.subr.mxu0 0.0
    %655 = vmatpush1.msra.mxu0 0.0
    %656 = vmatprep.subr.mxu0 0.0
    %657 = vmatpush1.msra.mxu0 0.0
    %658 = vmatprep.subr.mxu0 0.0
    %659 = vmatpush1.msra.mxu0 0.0
    %660 = vmatprep.subr.mxu0 0.0
    %661 = vmatpush1.msra.mxu0 0.0
    %662 = vmatprep.subr.mxu0 0.0
    %663 = vmatpush1.msra.mxu0 0.0
    %664 = vmatprep.subr.mxu0 0.0
    %665 = vmatpush1.msra.mxu0 0.0
    %666 = vmatprep.subr.mxu0 0.0
    %667 = vmatpush1.msra.mxu0 0.0
    %668 = vmatprep.subr.mxu0 0.0
    %669 = vmatpush1.msra.mxu0 0.0
    %670 = vmatprep.subr.mxu0 0.0
    %671 = vmatpush1.msra.mxu0 0.0
    %672 = vmatprep.subr.mxu0 0.0
    %673 = vmatpush1.msra.mxu0 0.0
    %674 = vmatprep.subr.mxu0 0.0
    %675 = vmatpush1.msra.mxu0 0.0
    %676 = vmatprep.subr.mxu0 0.0
    %677 = vmatpush1.msra.mxu0 0.0
    %678 = vmatprep.subr.mxu0 0.0
    %679 = vmatpush1.msra.mxu0 0.0
    %680 = vmatprep.subr.mxu0 0.0
    %681 = vmatpush1.msra.mxu0 0.0
    %682 = vmatprep.subr.mxu0 0.0
    %683 = vmatpush1.msra.mxu0 0.0
    %684 = vmatprep.subr.mxu0 0.0
    %685 = vmatpush1.msra.mxu0 0.0
    %686 = vmatprep.subr.mxu0 0.0
    %687 = vmatpush1.msra.mxu0 0.0
    %688 = vmatprep.subr.mxu0 0.0
    %689 = vmatpush1.msra.mxu0 0.0
    %690 = vmatprep.subr.mxu0 0.0
    %691 = vmatpush1.msra.mxu0 0.0
    %692 = vmatprep.subr.mxu0 0.0
    %693 = vmatpush1.msra.mxu0 0.0
    %694 = vmatprep.subr.mxu0 0.0
    %695 = vmatpush1.msra.mxu0 0.0
    %696 = vmatprep.subr.mxu0 0.0
    %697 = vmatpush1.msra.mxu0 0.0
    %698 = vmatprep.subr.mxu0 0.0
    %699 = vmatpush1.msra.mxu0 0.0
    %700 = vmatprep.subr.mxu0 0.0
    %701 = vmatpush1.msra.mxu0 0.0
    %702 = vmatprep.subr.mxu0 0.0
    %703 = vmatpush1.msra.mxu0 0.0
    %704 = vmatprep.subr.mxu0 0.0
    %705 = vmatpush1.msra.mxu0 0.0
    %706 = vmatprep.subr.mxu0 0.0
    %707 = vmatpush1.msra.mxu0 0.0
    %708 = vmatprep.subr.mxu0 0.0
    %709 = vmatpush1.msra.mxu0 0.0
    %710 = vmatprep.subr.mxu0 0.0
    %711 = vmatpush1.msra.mxu0 0.0
    %712 = vmatprep.subr.mxu0 0.0
    %713 = vmatpush1.msra.mxu0 0.0
    %714 = vmatprep.mubr.f32.mxu0 0.0
    %715 = vmatmul.mubr.f32.gmra.mrb[0].mxu0 %v566
    %v716 = vpop.f32.mrb[0].mxu0
    %v717 = vadd.f32 1e-05, %v716
    %v718 = vpop.f32.mrb[0].mxu0
    %719 = vdwg.mxu0
    %v720 = vrsqrt.pop %v717
    %722 = vset.pattern.permute.xlu0 0
    %723 = vperm.xlu0 %722, %v720
    %v724 = vpop.permute.xlu0 %723
    %v726 = vmul.f32 %v643, %v724
    %v727 = vmul.f32 %v644, %v724
    %v728 = vadd.f32 %v554, %v556
    %729 = vadd.xlane.f32.xlu0 %v728
    %v730 = vpop.xlane.xlu0 %729
    %731 = vmatprep.subr.mxu0 0.0
    %732 = vmatpush1.msra.mxu0 %v730
    %733 = vmatprep.subr.mxu0 0.0
    %734 = vmatpush1.msra.mxu0 0.0
    %735 = vmatprep.subr.mxu0 0.0
    %736 = vmatpush1.msra.mxu0 0.0
    %737 = vmatprep.subr.mxu0 0.0
    %738 = vmatpush1.msra.mxu0 0.0
    %739 = vmatprep.subr.mxu0 0.0
    %740 = vmatpush1.msra.mxu0 0.0
    %741 = vmatprep.subr.mxu0 0.0
    %742 = vmatpush1.msra.mxu0 0.0
    %743 = vmatprep.subr.mxu0 0.0
    %744 = vmatpush1.msra.mxu0 0.0
    %745 = vmatprep.subr.mxu0 0.0
    %746 = vmatpush1.msra.mxu0 0.0
    %747 = vmatprep.subr.mxu0 0.0
    %748 = vmatpush1.msra.mxu0 0.0
    %749 = vmatprep.subr.mxu0 0.0
    %750 = vmatpush1.msra.mxu0 0.0
    %751 = vmatprep.subr.mxu0 0.0
    %752 = vmatpush1.msra.mxu0 0.0
    %753 = vmatprep.subr.mxu0 0.0
    %754 = vmatpush1.msra.mxu0 0.0
    %755 = vmatprep.subr.mxu0 0.0
    %756 = vmatpush1.msra.mxu0 0.0
    %757 = vmatprep.subr.mxu0 0.0
    %758 = vmatpush1.msra.mxu0 0.0
    %759 = vmatprep.subr.mxu0 0.0
    %760 = vmatpush1.msra.mxu0 0.0
    %761 = vmatprep.subr.mxu0 0.0
    %762 = vmatpush1.msra.mxu0 0.0
    %763 = vmatprep.subr.mxu0 0.0
    %764 = vmatpush1.msra.mxu0 0.0
    %765 = vmatprep.subr.mxu0 0.0
    %766 = vmatpush1.msra.mxu0 0.0
    %767 = vmatprep.subr.mxu0 0.0
    %768 = vmatpush1.msra.mxu0 0.0
    %769 = vmatprep.subr.mxu0 0.0
    %770 = vmatpush1.msra.mxu0 0.0
    %771 = vmatprep.subr.mxu0 0.0
    %772 = vmatpush1.msra.mxu0 0.0
    %773 = vmatprep.subr.mxu0 0.0
    %774 = vmatpush1.msra.mxu0 0.0
    %775 = vmatprep.subr.mxu0 0.0
    %776 = vmatpush1.msra.mxu0 0.0
    %777 = vmatprep.subr.mxu0 0.0
    %778 = vmatpush1.msra.mxu0 0.0
    %779 = vmatprep.subr.mxu0 0.0
    %780 = vmatpush1.msra.mxu0 0.0
    %781 = vmatprep.subr.mxu0 0.0
    %782 = vmatpush1.msra.mxu0 0.0
    %783 = vmatprep.subr.mxu0 0.0
    %784 = vmatpush1.msra.mxu0 0.0
    %785 = vmatprep.subr.mxu0 0.0
    %786 = vmatpush1.msra.mxu0 0.0
    %787 = vmatprep.subr.mxu0 0.0
    %788 = vmatpush1.msra.mxu0 0.0
    %789 = vmatprep.subr.mxu0 0.0
    %790 = vmatpush1.msra.mxu0 0.0
    %791 = vmatprep.subr.mxu0 0.0
    %792 = vmatpush1.msra.mxu0 0.0
    %793 = vmatprep.subr.mxu0 0.0
    %794 = vmatpush1.msra.mxu0 0.0
    %795 = vmatprep.mubr.f32.mxu0 0.0
    %796 = vmatmul.mubr.f32.gmra.mrb[0].mxu0 %v566
    %v797 = vpop.f32.mrb[0].mxu0
    %v798 = vadd.f32 0.0, %v797
    %v799 = vpop.f32.mrb[0].mxu0
    %800 = vdwg.mxu0
    %802 = vset.pattern.permute.xlu0 0
    %803 = vperm.xlu0 %802, %v798
    %v804 = vpop.permute.xlu0 %803
    %v806 = vsub.f32 %v554, %v804
    %v807 = vsub.f32 %v556, %v804
    %v808 = vmul.f32 %v806, %v806
    %v809 = vmul.f32 %v807, %v807
    %v810 = vadd.f32 %v808, %v809
    %811 = vadd.xlane.f32.xlu0 %v810
    %v812 = vpop.xlane.xlu0 %811
    %813 = vmatprep.subr.mxu0 0.0
    %814 = vmatpush1.msra.mxu0 %v812
    %815 = vmatprep.subr.mxu0 0.0
    %816 = vmatpush1.msra.mxu0 0.0
    %817 = vmatprep.subr.mxu0 0.0
    %818 = vmatpush1.msra.mxu0 0.0
    %819 = vmatprep.subr.mxu0 0.0
    %820 = vmatpush1.msra.mxu0 0.0
    %821 = vmatprep.subr.mxu0 0.0
    %822 = vmatpush1.msra.mxu0 0.0
    %823 = vmatprep.subr.mxu0 0.0
    %824 = vmatpush1.msra.mxu0 0.0
    %825 = vmatprep.subr.mxu0 0.0
    %826 = vmatpush1.msra.mxu0 0.0
    %827 = vmatprep.subr.mxu0 0.0
    %828 = vmatpush1.msra.mxu0 0.0
    %829 = vmatprep.subr.mxu0 0.0
    %830 = vmatpush1.msra.mxu0 0.0
    %831 = vmatprep.subr.mxu0 0.0
    %832 = vmatpush1.msra.mxu0 0.0
    %833 = vmatprep.subr.mxu0 0.0
    %834 = vmatpush1.msra.mxu0 0.0
    %835 = vmatprep.subr.mxu0 0.0
    %836 = vmatpush1.msra.mxu0 0.0
    %837 = vmatprep.subr.mxu0 0.0
    %838 = vmatpush1.msra.mxu0 0.0
    %839 = vmatprep.subr.mxu0 0.0
    %840 = vmatpush1.msra.mxu0 0.0
    %841 = vmatprep.subr.mxu0 0.0
    %842 = vmatpush1.msra.mxu0 0.0
    %843 = vmatprep.subr.mxu0 0.0
    %844 = vmatpush1.msra.mxu0 0.0
    %845 = vmatprep.subr.mxu0 0.0
    %846 = vmatpush1.msra.mxu0 0.0
    %847 = vmatprep.subr.mxu0 0.0
    %848 = vmatpush1.msra.mxu0 0.0
    %849 = vmatprep.subr.mxu0 0.0
    %850 = vmatpush1.msra.mxu0 0.0
    %851 = vmatprep.subr.mxu0 0.0
    %852 = vmatpush1.msra.mxu0 0.0
    %853 = vmatprep.subr.mxu0 0.0
    %854 = vmatpush1.msra.mxu0 0.0
    %855 = vmatprep.subr.mxu0 0.0
    %856 = vmatpush1.msra.mxu0 0.0
    %857 = vmatprep.subr.mxu0 0.0
    %858 = vmatpush1.msra.mxu0 0.0
    %859 = vmatprep.subr.mxu0 0.0
    %860 = vmatpush1.msra.mxu0 0.0
    %861 = vmatprep.subr.mxu0 0.0
    %862 = vmatpush1.msra.mxu0 0.0
    %863 = vmatprep.subr.mxu0 0.0
    %864 = vmatpush1.msra.mxu0 0.0
    %865 = vmatprep.subr.mxu0 0.0
    %866 = vmatpush1.msra.mxu0 0.0
    %867 = vmatprep.subr.mxu0 0.0
    %868 = vmatpush1.msra.mxu0 0.0
    %869 = vmatprep.subr.mxu0 0.0
    %870 = vmatpush1.msra.mxu0 0.0
    %871 = vmatprep.subr.mxu0 0.0
    %872 = vmatpush1.msra.mxu0 0.0
    %873 = vmatprep.subr.mxu0 0.0
    %874 = vmatpush1.msra.mxu0 0.0
    %875 = vmatprep.subr.mxu0 0.0
    %876 = vmatpush1.msra.mxu0 0.0
    %877 = vmatprep.mubr.f32.mxu0 0.0
    %878 = vmatmul.mubr.f32.gmra.mrb[0].mxu0 %v566
    %v879 = vpop.f32.mrb[0].mxu0
    %v880 = vadd.f32 1e-05, %v879
    %v881 = vpop.f32.mrb[0].mxu0
    %882 = vdwg.mxu0
    %v883 = vrsqrt.pop %v880
    %885 = vset.pattern.permute.xlu0 0
    %886 = vperm.xlu0 %885, %v883
    %v887 = vpop.permute.xlu0 %886
    %v889 = vmul.f32 %v806, %v887
    %v890 = vmul.f32 %v807, %v887
    %891 = vst [vmem:[#allocation8] sm:$0xff] %v726
    %892 = vst [vmem:[#allocation8 + $0x8] sm:$0xff] %v727
    %893 = vst [vmem:[#allocation8 + $0x10] sm:$0xff] %v889
    %894 = vst [vmem:[#allocation8 + $0x18] sm:$0xff] %v890
    // Predicated region
    $region26: #{tpu_custom_call.1} parent=1 // pred_check
      _
    $region27: #{tpu_custom_call.1} parent=1 // pred_check_branch
      %896 = sbr.rel (0) target = $region29
    $region28: #{tpu_custom_call.1} parent=1 // pred_region
      %s898 = ssub.s32 512, 512
      %899 = vsyncadd [#allocation4], %s898
      %s901 = sshll.u32 [#allocation8], 4
      %s902 = int_to_ptr.vmem [resolvable:$true] %s901
      %904 = dma.vmem_to_hbm [thread:$0]  %s902, 512, %s3, [#allocation4]
    $region29: #{tpu_custom_call.1} parent=1 // pred_fallthru
      _
    // Predicated region
    $region30: #{tpu_custom_call.1} parent=1 // pred_check
      _
    $region31: #{tpu_custom_call.1} parent=1 // pred_check_branch
      %906 = sbr.rel (0) target = $region33
    $region32: #{tpu_custom_call.1} parent=1 // pred_region
      %907 = dma.done [#allocation4], 512
    $region33: #{tpu_custom_call.1} parent=1 // pred_fallthru
      _
    %908 = vsyncpa [#allocation3], 1
    %909 = vsyncpa [#allocation6], 1
    %910 = vsyncpa [#allocation4], 1

</llo_original>
